<compile_context>
chip_gen: v7x
topology: tpu7x:2x2x1
jax: 0.10.0
libtpu: 0.0.40
codegen_flags: <defaults>
</compile_context>

<pallas_src>
import jax
import jax.numpy as jnp
from jax.experimental import pallas as pl
from jax.experimental.pallas import tpu as pltpu

_LANES = 128
_MAX_TILE_ROWS = 1024      # 1024*128*4B = 512 KiB / input tile; x2 inputs x2 buffers = 2 MiB
_NEG_BIG = -1e30           # softplus(_NEG_BIG) == 0 exactly in f32


def _round_up(x, m):
    return ((x + m - 1) // m) * m


def _binary_loss_kernel(a_ref, b_ref, out_ref):
    # a_ref / b_ref: (tile_rows, 128) lane-dense blocks.
    # out_ref: (1, 1, 128) per-tile partial sums.
    a = a_ref[...].astype(jnp.float32)
    b = b_ref[...].astype(jnp.float32)
    d = a - b
    # Stable softplus(d) = max(d, 0) + log1p(exp(-|d|)).  log(1 + x) is accurate
    # enough here: whenever exp(-|d|) underflows the `1 +`, the max(d, 0) term
    # dominates the row loss by many decades.  Padded elements give exactly 0.
    sp = jnp.maximum(d, 0.0) + jnp.log(1.0 + jnp.exp(-jnp.abs(d)))
    # Lane-dense partial reduction; the final scalar sum is done in the wrapper.
    out_ref[...] = jnp.sum(sp, axis=0, keepdims=True).reshape(1, 1, _LANES)


def binary_loss(pos_score, neg_score, *, max_tile_rows=_MAX_TILE_ROWS):
    """pos_score: [N, 2], neg_score: [M, 2]  ->  scalar f32 loss."""
    assert pos_score.ndim == 2 and pos_score.shape[-1] == 2, pos_score.shape
    assert neg_score.ndim == 2 and neg_score.shape[-1] == 2, neg_score.shape

    # Closed-form columns: loss = sum(softplus(a - b)).
    a = jnp.concatenate([pos_score[:, 0], neg_score[:, 1]])   # [N + M]
    b = jnp.concatenate([pos_score[:, 1], neg_score[:, 0]])   # [N + M]

    total = a.shape[0]
    rows_needed = pl.cdiv(total, _LANES)
    tile_rows = min(max_tile_rows, _round_up(rows_needed, 8))
    padded_rows = _round_up(rows_needed, tile_rows)
    grid = padded_rows // tile_rows
    padded_len = padded_rows * _LANES

    pad = padded_len - total
    if pad:
        a = jnp.concatenate([a, jnp.full((pad,), _NEG_BIG, dtype=a.dtype)])
        b = jnp.concatenate([b, jnp.zeros((pad,), dtype=b.dtype)])
    a = a.reshape(padded_rows, _LANES)
    b = b.reshape(padded_rows, _LANES)

    bytes_in = 2 * padded_len * a.dtype.itemsize
    partials = pl.pallas_call(
        _binary_loss_kernel,
        out_shape=jax.ShapeDtypeStruct((grid, 1, _LANES), jnp.float32),
        grid_spec=pltpu.PrefetchScalarGridSpec(
            num_scalar_prefetch=0,
            grid=(grid,),
            in_specs=[
                pl.BlockSpec((tile_rows, _LANES), lambda i: (i, 0)),
                pl.BlockSpec((tile_rows, _LANES), lambda i: (i, 0)),
            ],
            out_specs=pl.BlockSpec((1, 1, _LANES), lambda i: (i, 0, 0)),
        ),
        compiler_params=pltpu.CompilerParams(
            dimension_semantics=("parallel",)),
        cost_estimate=pl.CostEstimate(
            flops=6 * padded_len,
            transcendentals=2 * padded_len,
            bytes_accessed=bytes_in + grid * _LANES * 4),
    )(a, b)

    # Tiny final reduction over (num_tiles, 1, 128) partials.
    return jnp.sum(partials)


def _reference(pos_score, neg_score):
    # Pure-JAX reference for sanity checking.
    pos_ls = jax.nn.log_softmax(pos_score.astype(jnp.float32), axis=1)
    neg_ls = jax.nn.log_softmax(neg_score.astype(jnp.float32), axis=1)
    return jnp.sum(-pos_ls[:, 1]) + jnp.sum(-neg_ls[:, 0])


if __name__ == "__main__":
    key = jax.random.PRNGKey(0)
    k1, k2 = jax.random.split(key)

    # Small shapes consistent with the module: N samples, 2 class scores each.
    pos_score = jax.random.normal(k1, (8, 2), dtype=jnp.float32)
    neg_score = jax.random.normal(k2, (8, 2), dtype=jnp.float32)

    loss = binary_loss(pos_score, neg_score)
    jax.block_until_ready(loss)
    ref = _reference(pos_score, neg_score)
    assert jnp.allclose(loss, ref, rtol=1e-5, atol=1e-5), (loss, ref)

    # Also exercise N != M and a multi-tile grid (small tile to force grid > 1).
    k3, k4 = jax.random.split(k1)
    pos_big = jax.random.normal(k3, (700, 2), dtype=jnp.float32)
    neg_big = jax.random.normal(k4, (600, 2), dtype=jnp.float32)
    loss_big = binary_loss(pos_big, neg_big, max_tile_rows=8)
    jax.block_until_ready(loss_big)
    ref_big = _reference(pos_big, neg_big)
    assert jnp.allclose(loss_big, ref_big, rtol=1e-4, atol=1e-3), (loss_big, ref_big)

    print("KERNEL_OK")
</pallas_src>

<mosaic_0001>
module attributes {stable_mosaic.version = 11 : i64} {
  func.func @_binary_loss_kernel(%arg0: i32, %arg1: memref<8x128xf32, #tpu.memory_space<vmem>>, %arg2: memref<8x128xf32, #tpu.memory_space<vmem>>, %arg3: memref<1x1x128xf32, #tpu.memory_space<vmem>>) attributes {dimension_semantics = [#tpu.dimension_semantics<parallel>], iteration_bounds = array<i64: 1>, scalar_prefetch = 0 : i64, scratch_operands = 0 : i64, tpu.core_type = #tpu.core_type<tc>, window_params = [{transform_indices = @transform_0, window_bounds = array<i64: 8, 128>}, {transform_indices = @transform_1, window_bounds = array<i64: 8, 128>}, {transform_indices = @transform_2, window_bounds = array<i64: 1, 1, 128>}]} {
    %c0 = arith.constant 0 : index
    %c0_0 = arith.constant 0 : index
    %0 = vector.load %arg1[%c0, %c0_0] : memref<8x128xf32, #tpu.memory_space<vmem>>, vector<8x128xf32>
    %c0_1 = arith.constant 0 : index
    %c0_2 = arith.constant 0 : index
    %1 = vector.load %arg2[%c0_1, %c0_2] : memref<8x128xf32, #tpu.memory_space<vmem>>, vector<8x128xf32>
    %2 = arith.subf %0, %1 : vector<8x128xf32>
    %cst = arith.constant 0.000000e+00 : f32
    %3 = vector.broadcast %cst : f32 to vector<8x128xf32>
    %4 = arith.maximumf %2, %3 : vector<8x128xf32>
    %5 = math.absf %2 : vector<8x128xf32>
    %cst_3 = arith.constant 0.000000e+00 : f32
    %6 = vector.broadcast %cst_3 : f32 to vector<8x128xf32>
    %7 = arith.subf %6, %5 : vector<8x128xf32>
    %8 = math.exp %7 : vector<8x128xf32>
    %cst_4 = arith.constant 1.000000e+00 : f32
    %9 = vector.broadcast %cst_4 : f32 to vector<8x128xf32>
    %10 = arith.addf %9, %8 : vector<8x128xf32>
    %11 = math.log %10 : vector<8x128xf32>
    %12 = arith.addf %4, %11 : vector<8x128xf32>
    %cst_5 = arith.constant dense<0.000000e+00> : vector<128xf32>
    %13 = vector.multi_reduction <add>, %12, %cst_5 [0] : vector<8x128xf32> to vector<128xf32>
    %14 = vector.shape_cast %13 : vector<128xf32> to vector<1x128xf32>
    %15 = vector.shape_cast %14 : vector<1x128xf32> to vector<1x1x128xf32>
    %c0_6 = arith.constant 0 : index
    %c0_7 = arith.constant 0 : index
    %c0_8 = arith.constant 0 : index
    %16 = vector.load %arg3[%c0_6, %c0_7, %c0_8] : memref<1x1x128xf32, #tpu.memory_space<vmem>>, vector<1x1x128xf32>
    tpu.vector_store %arg3[%c0_6, %c0_7, %c0_8], %15 {strides = array<i32>} : memref<1x1x128xf32, #tpu.memory_space<vmem>>, vector<1x1x128xf32>,
    return
  }
  func.func @transform_0(%arg0: i32) -> (i32, i32) {
    %c0_i32 = arith.constant 0 : i32
    %c0_i32_0 = arith.constant 0 : i32
    return %arg0, %c0_i32 : i32, i32
  }
  func.func @transform_1(%arg0: i32) -> (i32, i32) {
    %c0_i32 = arith.constant 0 : i32
    %c0_i32_0 = arith.constant 0 : i32
    return %arg0, %c0_i32 : i32, i32
  }
  func.func @transform_2(%arg0: i32) -> (i32, i32, i32) {
    %c0_i32 = arith.constant 0 : i32
    %c0_i32_0 = arith.constant 0 : i32
    %c0_i32_1 = arith.constant 0 : i32
    return %arg0, %c0_i32, %c0_i32_0 : i32, i32, i32
  }
}

</mosaic_0001>

<llo_original>
// kernel: tpu_custom_call.1
$region0: #{tpu_custom_call.1}
  #allocation0 [shape = 'u32[]', space=smem, size = 0x4, offset = 0x4, fixed_abs, tag = 'smem constant byte address 0x4 - core index']
  #allocation1 [shape = 'u32[144,128]{1,0:T(1,128)}', space=vmem, size = 0x12000, scoped, tag = 'internal scratch']
  %s0 = inlined_call_operand.hbm [shape: f32[8,128], index: 0, kind: input, shape index: {}]
  %s1 = inlined_call_operand.hbm [shape: f32[8,128], index: 1, kind: input, shape index: {}]
  %s2 = inlined_call_operand.hbm [shape: f32[1,1,128], index: 2, kind: output, shape index: {}]
  %s3 = sld [smem:[#allocation0]]
  $region26: #{tpu_custom_call.1} parent=0
    _
  %s5 = ssub.s32 1, %s3
  %s6 = scalar_select 0, %s5, %s3
  $region1: #{tpu_custom_call.1} parent=0
    #allocation2 [shape = 'u8[4096]{0}', space=vmem, size = 0x1000, scoped, tag = 'input window, operand 0, single buffered']
    #allocation3 [shape = 's32[1]{0}', space=sflag, size = 0x4, scoped, tag = 'scoped memory for tpu_custom_call.1']
    #allocation4 [shape = 's32[1]{0}', space=sflag, size = 0x4, scoped, tag = 'scoped memory for tpu_custom_call.1']
    #allocation5 [shape = 'u8[4096]{0}', space=vmem, size = 0x1000, scoped, tag = 'input window, operand 1, single buffered']
    #allocation6 [shape = 's32[1]{0}', space=sflag, size = 0x4, scoped, tag = 'scoped memory for tpu_custom_call.1']
    #allocation7 [shape = 'u8[512]{0}', space=vmem, size = 0x400, scoped, tag = 'output window, operand 0, single buffered']
    %7 = vsyncpa [#allocation3], 0
    %8 = vsyncpa [#allocation6], 0
    %9 = vsyncpa [#allocation4], 0
    // Predicated region
    $region2: #{tpu_custom_call.1} parent=1 // pred_check
      _
    $region3: #{tpu_custom_call.1} parent=1 // pred_check_branch
      %11 = sbr.rel (0) target = $region5
    $region4: #{tpu_custom_call.1} parent=1 // pred_region
      %s13 = ssub.s32 128, 128
      %14 = vsyncadd [#allocation3], %s13
      %s16 = sshll.u32 [#allocation2], 4
      %s17 = int_to_ptr.vmem [resolvable:$true] %s16
      %19 = dma.hbm_to_vmem [thread:$0]  %s0, 128, %s17, [#allocation3]
    $region5: #{tpu_custom_call.1} parent=1 // pred_fallthru
      _
    // Predicated region
    $region6: #{tpu_custom_call.1} parent=1 // pred_check
      _
    $region7: #{tpu_custom_call.1} parent=1 // pred_check_branch
      %21 = sbr.rel (0) target = $region9
    $region8: #{tpu_custom_call.1} parent=1 // pred_region
      %s23 = ssub.s32 128, 128
      %24 = vsyncadd [#allocation6], %s23
      %s26 = sshll.u32 [#allocation5], 4
      %s27 = int_to_ptr.vmem [resolvable:$true] %s26
      %29 = dma.hbm_to_vmem [thread:$0]  %s1, 128, %s27, [#allocation6]
    $region9: #{tpu_custom_call.1} parent=1 // pred_fallthru
      _
    // Predicated region
    $region10: #{tpu_custom_call.1} parent=1 // pred_check
      _
    $region11: #{tpu_custom_call.1} parent=1 // pred_check_branch
      %31 = sbr.rel (0) target = $region13
    $region12: #{tpu_custom_call.1} parent=1 // pred_region
      %32 = dma.done [#allocation3], 128
    $region13: #{tpu_custom_call.1} parent=1 // pred_fallthru
      _
    // Predicated region
    $region14: #{tpu_custom_call.1} parent=1 // pred_check
      _
    $region15: #{tpu_custom_call.1} parent=1 // pred_check_branch
      %34 = sbr.rel (0) target = $region17
    $region16: #{tpu_custom_call.1} parent=1 // pred_region
      %35 = dma.done [#allocation6], 128
    $region17: #{tpu_custom_call.1} parent=1 // pred_fallthru
      _
    %v36 = vld [vmem:[#allocation2] sm:$0xff]
    %v37 = vld [vmem:[#allocation5] sm:$0xff]
    %v38 = vsub.f32 %v36, %v37
    %v39 = vmax.f32 %v38, 0.0
    %v40 = vand.u32 2147483647, %v38
    %v41 = vsub.f32 0.0, %v40
    %v42 = vmul.f32 %v41, 1.442695
    %v43 = vpow.pop %v42
    %v44 = vadd.f32 %v43, 1.0
    %v45 = vlog2.pop %v44
    %v46 = vmul.f32 %v45, 0.6931472
    %v47 = vadd.f32 %v39, %v46
    %v48 = vrot.slane %v47, 4
    %v49 = vadd.f32 %v47, %v48
    %v50 = vrot.slane %v49, 2
    %v51 = vadd.f32 %v49, %v50
    %v52 = vrot.slane %v51, 1
    %v53 = vadd.f32 %v51, %v52
    %54 = vst [vmem:[#allocation7] sm:$0x1] %v53
    // Predicated region
    $region18: #{tpu_custom_call.1} parent=1 // pred_check
      _
    $region19: #{tpu_custom_call.1} parent=1 // pred_check_branch
      %56 = sbr.rel (0) target = $region21
    $region20: #{tpu_custom_call.1} parent=1 // pred_region
      %s58 = ssub.s32 16, 16
      %59 = vsyncadd [#allocation4], %s58
      %s61 = sshll.u32 [#allocation7], 4
      %s62 = int_to_ptr.vmem [resolvable:$true] %s61
      %64 = dma.vmem_to_hbm [thread:$0]  %s62, 16, %s2, [#allocation4]
    $region21: #{tpu_custom_call.1} parent=1 // pred_fallthru
      _
    // Predicated region
    $region22: #{tpu_custom_call.1} parent=1 // pred_check
      _
    $region23: #{tpu_custom_call.1} parent=1 // pred_check_branch
      %66 = sbr.rel (0) target = $region25
    $region24: #{tpu_custom_call.1} parent=1 // pred_region
      %67 = dma.done [#allocation4], 16
    $region25: #{tpu_custom_call.1} parent=1 // pred_fallthru
      _
    %68 = vsyncpa [#allocation3], 1
    %69 = vsyncpa [#allocation6], 1
    %70 = vsyncpa [#allocation4], 1

</llo_original>
